<compile_context>
chip_gen: v7x
topology: tpu7x:2x2x1
jax: 0.10.0
libtpu: 0.0.40
codegen_flags: <defaults>
</compile_context>

<pallas_src>
import numpy as np
import jax
import jax.numpy as jnp
from jax.experimental import pallas as pl
from jax.experimental.pallas import tpu as pltpu

HIDDEN_SIZE = (16, 32, 64)   # config.hidden_size
OUTPUT_SIZE = 4              # config.output_size
SEQ_LEN = 4                  # L: implied by x.view(-1, 32) with hidden_size[1] == 32


def _cdiv(a, b):
    return -(-a // b)


def _round_up(x, m):
    return ((x + m - 1) // m) * m


# --------------------------------------------------------------------------- #
# Kernel: one batch tile per grid step, everything (features, batch) in VMEM.  #
# --------------------------------------------------------------------------- #
def _forward_kernel(x_ref, wc1_ref, b1_ref, wc2_ref, b2_ref,
                    fw1_ref, fb1_ref, fw2_ref, fb2_ref, out_ref):
    half1 = wc1_ref.shape[0] // 2     # L2 * H0 = 32
    half2 = wc2_ref.shape[0] // 2     # H1 = 32

    xT = x_ref[...]                                                  # (L, TN)

    # ---- conv1: one banded matmul. Rows are pre-permuted so the MaxPool1d(2)
    # pair-max is a single full-block maximum, taken BEFORE the activation
    # (sigmoid is monotonic). The sigmoid's 0.5 input scale is folded into
    # wc1/b1, its output affine (0.5*t + 0.5) is folded into wc2/b2, so only a
    # bare tanh remains on the EUP.
    y1 = jnp.dot(wc1_ref[...], xT,
                 preferred_element_type=jnp.float32) + b1_ref[...]   # (2*half1, TN)
    t1 = jnp.tanh(jnp.maximum(y1[:half1, :], y1[half1:, :]))         # (half1, TN)

    # ---- conv2: one banded matmul; pool the pre-activation pair, then tanh.
    y2 = jnp.dot(wc2_ref[...], t1,
                 preferred_element_type=jnp.float32) + b2_ref[...]   # (2*half2, TN)
    a2 = jnp.tanh(jnp.maximum(y2[:half2, :], y2[half2:, :]))         # (half2, TN)

    # ---- fc1 + ReLU ----
    h = jnp.dot(fw1_ref[...], a2,
                preferred_element_type=jnp.float32) + fb1_ref[...]   # (H2, TN)
    h = jnp.maximum(h, 0.0)

    # ---- fc2: lane-dense (OUT, TN) unmasked store ----
    out_ref[...] = jnp.dot(fw2_ref[...], h,
                           preferred_element_type=jnp.float32) + fb2_ref[...]


# --------------------------------------------------------------------------- #
# One-time weight repacking (hoisted out of the forward call).                 #
# --------------------------------------------------------------------------- #
def prepare_params(params, L=SEQ_LEN):
    h0 = params["conv1_w"].shape[0]
    h1 = params["conv2_w"].shape[0]
    L2 = L // 2

    w1 = np.asarray(params["conv1_w"], np.float32)[:, 0, :]   # (H0, 3)
    cb1 = np.asarray(params["conv1_b"], np.float32)

    # Banded im2col weight for conv1, with rows permuted so that the top half
    # holds the FIRST element of every pool pair (positions 0,2,...) and the
    # bottom half the SECOND element (positions 1,3,...), both in pooled order.
    # => MaxPool1d(2) becomes max(y1[:L2*H0], y1[L2*H0:]).
    wc1 = np.zeros((L * h0, L), np.float32)
    b1 = np.zeros((L * h0, 1), np.float32)
    for j in range(L2):
        for half, pos in enumerate((2 * j, 2 * j + 1)):
            r0 = half * (L2 * h0) + j * h0
            b1[r0:r0 + h0, 0] = cb1
            for k in range(3):
                src = pos + k - 1
                if 0 <= src < L:
                    wc1[r0:r0 + h0, src] = w1[:, k]
    # Fold sigmoid input scale: sigmoid(y) = 0.5*tanh(0.5*y) + 0.5.
    wc1 *= 0.5
    b1 *= 0.5

    # Banded im2col weight for conv2 over the pooled (L2 positions, H0 channels)
    # input; rows are position-major (L2 == 2, so the pool pair is already
    # contiguous halves).
    w2 = np.asarray(params["conv2_w"], np.float32)             # (H1, H0, 3)
    cb2 = np.asarray(params["conv2_b"], np.float32)
    wc2 = np.zeros((L2 * h1, L2 * h0), np.float32)
    for j in range(L2):
        for k in range(3):
            src = j + k - 1
            if 0 <= src < L2:
                wc2[j * h1:(j + 1) * h1, src * h0:(src + 1) * h0] = w2[:, :, k]
    b2 = np.tile(cb2, L2).astype(np.float32)
    # Fold the sigmoid output affine: conv1 activation = 0.5*t + 0.5 where t is
    # the tanh value the kernel produces.  y2 = wc2 @ (0.5*t + 0.5) + b2.
    b2 = (b2 + 0.5 * wc2.sum(axis=1))[:, None]
    wc2 = 0.5 * wc2

    return dict(
        wc1=jnp.asarray(wc1), b1=jnp.asarray(b1),
        wc2=jnp.asarray(wc2), b2=jnp.asarray(b2),
        fw1=jnp.asarray(params["fc1_w"], jnp.float32),            # (H2, H1)
        fb1=jnp.asarray(params["fc1_b"], jnp.float32)[:, None],   # (H2, 1)
        fw2=jnp.asarray(params["fc2_w"], jnp.float32),            # (OUT, H2)
        fb2=jnp.asarray(params["fc2_b"], jnp.float32)[:, None],   # (OUT, 1)
    )


# --------------------------------------------------------------------------- #
# Transpose-free core: x given lane-major as (L, N), output returned (OUT, N). #
# --------------------------------------------------------------------------- #
def forward_lane_major(xT, prepared, *, tile_n=8192):
    L, N = xT.shape
    assert L == SEQ_LEN
    assert prepared["wc2"].shape[0] // 2 == 32      # x.view(-1, 32) requirement
    out_size = prepared["fw2"].shape[0]

    # Balanced, 128-multiple batch tiles (minimize dead padded columns); force
    # >= 2 grid steps when possible so v7x megacore uses both TensorCores.
    tile_n = max(128, _round_up(int(tile_n), 128))
    num_tiles = _cdiv(N, tile_n)
    if N > 128:
        num_tiles = max(num_tiles, 2)
    TN = _round_up(_cdiv(N, num_tiles), 128)
    N_pad = _round_up(N, TN)
    if N_pad != N:
        xT = jnp.pad(xT, ((0, 0), (0, N_pad - N)))
    grid = (N_pad // TN,)

    const2 = lambda i: (0, 0)

    def w_spec(arr):
        return pl.BlockSpec(arr.shape, const2)

    weight_bytes = 4 * sum(int(prepared[k].size) for k in prepared)
    flops_per_sample = 2 * (int(prepared["wc1"].size) + int(prepared["wc2"].size)
                            + int(prepared["fw1"].size) + int(prepared["fw2"].size))
    # Pool-before-activation halves transcendental work: one tanh per pooled row.
    trans_per_sample = (int(prepared["wc1"].shape[0]) // 2
                        + int(prepared["wc2"].shape[0]) // 2)
    cost = pl.CostEstimate(
        flops=flops_per_sample * N_pad,
        transcendentals=trans_per_sample * N_pad,
        bytes_accessed=4 * (L + out_size) * N_pad + weight_bytes,
    )

    # ~1.2 KB of live f32 temporaries per lane; keep the limit within v7x VMEM.
    vmem_limit = int(min(64 * 1024 * 1024, max(32 * 1024 * 1024, 1536 * TN)))

    out_T = pl.pallas_call(
        _forward_kernel,
        out_shape=jax.ShapeDtypeStruct((out_size, N_pad), jnp.float32),
        grid_spec=pltpu.PrefetchScalarGridSpec(
            num_scalar_prefetch=0,
            grid=grid,
            in_specs=[
                pl.BlockSpec((L, TN), lambda i: (0, i)),            # x tile
                w_spec(prepared["wc1"]), w_spec(prepared["b1"]),
                w_spec(prepared["wc2"]), w_spec(prepared["b2"]),
                w_spec(prepared["fw1"]), w_spec(prepared["fb1"]),
                w_spec(prepared["fw2"]), w_spec(prepared["fb2"]),
            ],
            out_specs=pl.BlockSpec((out_size, TN), lambda i: (0, i)),
        ),
        compiler_params=pltpu.CompilerParams(
            dimension_semantics=("parallel",),
            vmem_limit_bytes=vmem_limit,
        ),
        cost_estimate=cost,
    )(xT, prepared["wc1"], prepared["b1"], prepared["wc2"], prepared["b2"],
      prepared["fw1"], prepared["fb1"], prepared["fw2"], prepared["fb2"])

    return out_T[:, :N] if N_pad != N else out_T


# --------------------------------------------------------------------------- #
# PyTorch-layout adapter: (N, 1, L) -> (N, OUT).                               #
# The layout shims (two small transposes) live only here; performance-critical #
# callers that can produce (L, N) inputs / consume (OUT, N) outputs should use #
# forward_lane_major directly and pay zero extra HBM passes.                   #
# --------------------------------------------------------------------------- #
def neural_network_forward(x_ncl, prepared, *, tile_n=8192):
    N, cin, L = x_ncl.shape
    assert cin == 1 and L == SEQ_LEN
    xT = jnp.transpose(x_ncl[:, 0, :])                  # (L, N) compat shim
    out_T = forward_lane_major(xT, prepared, tile_n=tile_n)
    return jnp.transpose(out_T)                         # (N, OUT) compat shim


# --------------------------------------------------------------------------- #
# Parameter init (PyTorch-style uniform fan-in bounds) and pure-JAX reference. #
# --------------------------------------------------------------------------- #
def init_params(key, hidden_size=HIDDEN_SIZE, output_size=OUTPUT_SIZE):
    h0, h1, h2 = hidden_size
    ks = jax.random.split(key, 8)

    def u(k, shape, fan_in):
        bound = 1.0 / jnp.sqrt(jnp.float32(fan_in))
        return jax.random.uniform(k, shape, jnp.float32, -bound, bound)

    return dict(
        conv1_w=u(ks[0], (h0, 1, 3), 1 * 3),
        conv1_b=u(ks[1], (h0,), 1 * 3),
        conv2_w=u(ks[2], (h1, h0, 3), h0 * 3),
        conv2_b=u(ks[3], (h1,), h0 * 3),
        fc1_w=u(ks[4], (h2, h1), h1),
        fc1_b=u(ks[5], (h2,), h1),
        fc2_w=u(ks[6], (output_size, h2), h2),
        fc2_b=u(ks[7], (output_size,), h2),
    )


def reference_forward(x_ncl, p):
    """Pure-JAX reference with PyTorch NCL conventions (for validation)."""
    def conv1d(x, w, b):
        y = jax.lax.conv_general_dilated(
            x, w, window_strides=(1,), padding=((1, 1),),
            dimension_numbers=("NCH", "OIH", "NCH"))
        return y + b[None, :, None]

    def pool(x):                                        # MaxPool1d(2)
        n, c, l = x.shape
        return jnp.max(x.reshape(n, c, l // 2, 2), axis=-1)

    x = pool(jax.nn.sigmoid(conv1d(x_ncl, p["conv1_w"], p["conv1_b"])))
    x = pool(jnp.tanh(conv1d(x, p["conv2_w"], p["conv2_b"])))
    x = x.reshape(-1, 32)                               # x.view(-1, 32)
    x = jax.nn.relu(x @ p["fc1_w"].T + p["fc1_b"])
    return x @ p["fc2_w"].T + p["fc2_b"]


if __name__ == "__main__":
    key = jax.random.PRNGKey(0)
    pkey, xkey = jax.random.split(key)
    params = init_params(pkey)
    prepared = prepare_params(params)

    N = 8
    x = jax.random.normal(xkey, (N, 1, SEQ_LEN), jnp.float32)

    out = jax.block_until_ready(neural_network_forward(x, prepared))
    ref = jax.block_until_ready(reference_forward(x, params))

    assert out.shape == (N, OUTPUT_SIZE), out.shape
    if not jnp.allclose(out, ref, atol=1e-4, rtol=1e-4):
        raise AssertionError(
            f"kernel/reference mismatch, max abs err = {jnp.max(jnp.abs(out - ref))}")
    print("KERNEL_OK")
</pallas_src>

<mosaic_0001>
module attributes {stable_mosaic.version = 11 : i64} {
  func.func @_forward_kernel(%arg0: i32, %arg1: memref<4x128xf32, #tpu.memory_space<vmem>>, %arg2: memref<64x4xf32, #tpu.memory_space<vmem>>, %arg3: memref<64x1xf32, #tpu.memory_space<vmem>>, %arg4: memref<64x32xf32, #tpu.memory_space<vmem>>, %arg5: memref<64x1xf32, #tpu.memory_space<vmem>>, %arg6: memref<64x32xf32, #tpu.memory_space<vmem>>, %arg7: memref<64x1xf32, #tpu.memory_space<vmem>>, %arg8: memref<4x64xf32, #tpu.memory_space<vmem>>, %arg9: memref<4x1xf32, #tpu.memory_space<vmem>>, %arg10: memref<4x128xf32, #tpu.memory_space<vmem>>) attributes {dimension_semantics = [#tpu.dimension_semantics<parallel>], iteration_bounds = array<i64: 1>, scalar_prefetch = 0 : i64, scratch_operands = 0 : i64, tpu.core_type = #tpu.core_type<tc>, window_params = [{transform_indices = @transform_0, window_bounds = array<i64: 4, 128>}, {pipeline_mode = #tpu.pipeline_mode<synchronous>, transform_indices = @transform_1, window_bounds = array<i64: 64, 4>}, {pipeline_mode = #tpu.pipeline_mode<synchronous>, transform_indices = @transform_2, window_bounds = array<i64: 64, 1>}, {pipeline_mode = #tpu.pipeline_mode<synchronous>, transform_indices = @transform_3, window_bounds = array<i64: 64, 32>}, {pipeline_mode = #tpu.pipeline_mode<synchronous>, transform_indices = @transform_4, window_bounds = array<i64: 64, 1>}, {pipeline_mode = #tpu.pipeline_mode<synchronous>, transform_indices = @transform_5, window_bounds = array<i64: 64, 32>}, {pipeline_mode = #tpu.pipeline_mode<synchronous>, transform_indices = @transform_6, window_bounds = array<i64: 64, 1>}, {pipeline_mode = #tpu.pipeline_mode<synchronous>, transform_indices = @transform_7, window_bounds = array<i64: 4, 64>}, {pipeline_mode = #tpu.pipeline_mode<synchronous>, transform_indices = @transform_8, window_bounds = array<i64: 4, 1>}, {transform_indices = @transform_9, window_bounds = array<i64: 4, 128>}]} {
    %c0 = arith.constant 0 : index
    %c0_0 = arith.constant 0 : index
    %0 = vector.load %arg1[%c0, %c0_0] : memref<4x128xf32, #tpu.memory_space<vmem>>, vector<4x128xf32>
    %c0_1 = arith.constant 0 : index
    %c0_2 = arith.constant 0 : index
    %1 = vector.load %arg2[%c0_1, %c0_2] : memref<64x4xf32, #tpu.memory_space<vmem>>, vector<64x4xf32>
    %cst = arith.constant dense<0.000000e+00> : vector<64x128xf32>
    %2 = tpu.matmul %1, %0, %cst {dimension_numbers = #tpu.dot_dimension_numbers<[1], [0], [0], [1], [0, 0, 1, 1], [], []>} : vector<64x4xf32>, vector<4x128xf32>, vector<64x128xf32> -> vector<64x128xf32>
    %c0_3 = arith.constant 0 : index
    %c0_4 = arith.constant 0 : index
    %3 = vector.load %arg3[%c0_3, %c0_4] : memref<64x1xf32, #tpu.memory_space<vmem>>, vector<64x1xf32>
    %4 = vector.broadcast %3 : vector<64x1xf32> to vector<64x128xf32>
    %5 = arith.addf %2, %4 : vector<64x128xf32>
    %6 = vector.extract_strided_slice %5 {offsets = [0, 0], sizes = [32, 128], strides = [1, 1]} : vector<64x128xf32> to vector<32x128xf32>
    %7 = vector.extract_strided_slice %5 {offsets = [32, 0], sizes = [32, 128], strides = [1, 1]} : vector<64x128xf32> to vector<32x128xf32>
    %8 = arith.maximumf %6, %7 : vector<32x128xf32>
    %9 = math.tanh %8 : vector<32x128xf32>
    %c0_5 = arith.constant 0 : index
    %c0_6 = arith.constant 0 : index
    %10 = vector.load %arg4[%c0_5, %c0_6] : memref<64x32xf32, #tpu.memory_space<vmem>>, vector<64x32xf32>
    %cst_7 = arith.constant dense<0.000000e+00> : vector<64x128xf32>
    %11 = tpu.matmul %10, %9, %cst_7 {dimension_numbers = #tpu.dot_dimension_numbers<[1], [0], [0], [1], [0, 0, 1, 1], [], []>} : vector<64x32xf32>, vector<32x128xf32>, vector<64x128xf32> -> vector<64x128xf32>
    %c0_8 = arith.constant 0 : index
    %c0_9 = arith.constant 0 : index
    %12 = vector.load %arg5[%c0_8, %c0_9] : memref<64x1xf32, #tpu.memory_space<vmem>>, vector<64x1xf32>
    %13 = vector.broadcast %12 : vector<64x1xf32> to vector<64x128xf32>
    %14 = arith.addf %11, %13 : vector<64x128xf32>
    %15 = vector.extract_strided_slice %14 {offsets = [0, 0], sizes = [32, 128], strides = [1, 1]} : vector<64x128xf32> to vector<32x128xf32>
    %16 = vector.extract_strided_slice %14 {offsets = [32, 0], sizes = [32, 128], strides = [1, 1]} : vector<64x128xf32> to vector<32x128xf32>
    %17 = arith.maximumf %15, %16 : vector<32x128xf32>
    %18 = math.tanh %17 : vector<32x128xf32>
    %c0_10 = arith.constant 0 : index
    %c0_11 = arith.constant 0 : index
    %19 = vector.load %arg6[%c0_10, %c0_11] : memref<64x32xf32, #tpu.memory_space<vmem>>, vector<64x32xf32>
    %cst_12 = arith.constant dense<0.000000e+00> : vector<64x128xf32>
    %20 = tpu.matmul %19, %18, %cst_12 {dimension_numbers = #tpu.dot_dimension_numbers<[1], [0], [0], [1], [0, 0, 1, 1], [], []>} : vector<64x32xf32>, vector<32x128xf32>, vector<64x128xf32> -> vector<64x128xf32>
    %c0_13 = arith.constant 0 : index
    %c0_14 = arith.constant 0 : index
    %21 = vector.load %arg7[%c0_13, %c0_14] : memref<64x1xf32, #tpu.memory_space<vmem>>, vector<64x1xf32>
    %22 = vector.broadcast %21 : vector<64x1xf32> to vector<64x128xf32>
    %23 = arith.addf %20, %22 : vector<64x128xf32>
    %cst_15 = arith.constant 0.000000e+00 : f32
    %24 = vector.broadcast %cst_15 : f32 to vector<64x128xf32>
    %25 = arith.maximumf %23, %24 : vector<64x128xf32>
    %c0_16 = arith.constant 0 : index
    %c0_17 = arith.constant 0 : index
    %26 = vector.load %arg8[%c0_16, %c0_17] : memref<4x64xf32, #tpu.memory_space<vmem>>, vector<4x64xf32>
    %cst_18 = arith.constant dense<0.000000e+00> : vector<4x128xf32>
    %27 = tpu.matmul %26, %25, %cst_18 {dimension_numbers = #tpu.dot_dimension_numbers<[1], [0], [0], [1], [0, 0, 1, 1], [], []>} : vector<4x64xf32>, vector<64x128xf32>, vector<4x128xf32> -> vector<4x128xf32>
    %c0_19 = arith.constant 0 : index
    %c0_20 = arith.constant 0 : index
    %28 = vector.load %arg9[%c0_19, %c0_20] : memref<4x1xf32, #tpu.memory_space<vmem>>, vector<4x1xf32>
    %29 = vector.broadcast %28 : vector<4x1xf32> to vector<4x128xf32>
    %30 = arith.addf %27, %29 : vector<4x128xf32>
    %c0_21 = arith.constant 0 : index
    %c0_22 = arith.constant 0 : index
    %31 = vector.load %arg10[%c0_21, %c0_22] : memref<4x128xf32, #tpu.memory_space<vmem>>, vector<4x128xf32>
    tpu.vector_store %arg10[%c0_21, %c0_22], %30 {strides = array<i32>} : memref<4x128xf32, #tpu.memory_space<vmem>>, vector<4x128xf32>,
    return
  }
  func.func @transform_0(%arg0: i32) -> (i32, i32) {
    %c0_i32 = arith.constant 0 : i32
    %c0_i32_0 = arith.constant 0 : i32
    return %c0_i32, %arg0 : i32, i32
  }
  func.func @transform_1(%arg0: i32) -> (i32, i32) {
    %c0_i32 = arith.constant 0 : i32
    %c0_i32_0 = arith.constant 0 : i32
    %c0_i32_1 = arith.constant 0 : i32
    return %c0_i32, %c0_i32_0 : i32, i32
  }
  func.func @transform_2(%arg0: i32) -> (i32, i32) {
    %c0_i32 = arith.constant 0 : i32
    %c0_i32_0 = arith.constant 0 : i32
    %c0_i32_1 = arith.constant 0 : i32
    return %c0_i32, %c0_i32_0 : i32, i32
  }
  func.func @transform_3(%arg0: i32) -> (i32, i32) {
    %c0_i32 = arith.constant 0 : i32
    %c0_i32_0 = arith.constant 0 : i32
    %c0_i32_1 = arith.constant 0 : i32
    return %c0_i32, %c0_i32_0 : i32, i32
  }
  func.func @transform_4(%arg0: i32) -> (i32, i32) {
    %c0_i32 = arith.constant 0 : i32
    %c0_i32_0 = arith.constant 0 : i32
    %c0_i32_1 = arith.constant 0 : i32
    return %c0_i32, %c0_i32_0 : i32, i32
  }
  func.func @transform_5(%arg0: i32) -> (i32, i32) {
    %c0_i32 = arith.constant 0 : i32
    %c0_i32_0 = arith.constant 0 : i32
    %c0_i32_1 = arith.constant 0 : i32
    return %c0_i32, %c0_i32_0 : i32, i32
  }
  func.func @transform_6(%arg0: i32) -> (i32, i32) {
    %c0_i32 = arith.constant 0 : i32
    %c0_i32_0 = arith.constant 0 : i32
    %c0_i32_1 = arith.constant 0 : i32
    return %c0_i32, %c0_i32_0 : i32, i32
  }
  func.func @transform_7(%arg0: i32) -> (i32, i32) {
    %c0_i32 = arith.constant 0 : i32
    %c0_i32_0 = arith.constant 0 : i32
    %c0_i32_1 = arith.constant 0 : i32
    return %c0_i32, %c0_i32_0 : i32, i32
  }
  func.func @transform_8(%arg0: i32) -> (i32, i32) {
    %c0_i32 = arith.constant 0 : i32
    %c0_i32_0 = arith.constant 0 : i32
    %c0_i32_1 = arith.constant 0 : i32
    return %c0_i32, %c0_i32_0 : i32, i32
  }
  func.func @transform_9(%arg0: i32) -> (i32, i32) {
    %c0_i32 = arith.constant 0 : i32
    %c0_i32_0 = arith.constant 0 : i32
    return %c0_i32, %arg0 : i32, i32
  }
}

</mosaic_0001>

<llo_original>
// kernel: tpu_custom_call.1
$region0: #{tpu_custom_call.1}
  #allocation0 [shape = 'u32[]', space=smem, size = 0x4, offset = 0x4, fixed_abs, tag = 'smem constant byte address 0x4 - core index']
  #allocation1 [shape = 'u32[144,128]{1,0:T(1,128)}', space=vmem, size = 0x12000, scoped, tag = 'internal scratch']
  %s0 = inlined_call_operand.vmem [shape: f32[4,128], index: 0, kind: input, shape index: {}]
  %s1 = inlined_call_operand.vmem [shape: f32[64,4], index: 1, kind: input, shape index: {}]
  %s2 = inlined_call_operand.vmem [shape: f32[64,1], index: 2, kind: input, shape index: {}]
  %s3 = inlined_call_operand.vmem [shape: f32[64,32], index: 3, kind: input, shape index: {}]
  %s4 = inlined_call_operand.vmem [shape: f32[64,1], index: 4, kind: input, shape index: {}]
  %s5 = inlined_call_operand.vmem [shape: f32[64,32], index: 5, kind: input, shape index: {}]
  %s6 = inlined_call_operand.vmem [shape: f32[64,1], index: 6, kind: input, shape index: {}]
  %s7 = inlined_call_operand.vmem [shape: f32[4,64], index: 7, kind: input, shape index: {}]
  %s8 = inlined_call_operand.vmem [shape: f32[4,1], index: 8, kind: input, shape index: {}]
  %s9 = inlined_call_operand.hbm [shape: f32[4,128], index: 9, kind: output, shape index: {}]
  %s10 = sld [smem:[#allocation0]]
  $region46: #{tpu_custom_call.1} parent=0
    _
  %s12 = ssub.s32 1, %s10
  %s13 = scalar_select 0, %s12, %s10
  $region1: #{tpu_custom_call.1} parent=0
    #allocation2 [shape = 'u8[2048]{0}', space=vmem, size = 0x800, scoped, tag = 'output window, operand 0, single buffered']
    #allocation3 [shape = 's32[1]{0}', space=sflag, size = 0x4, scoped, tag = 'scoped memory for tpu_custom_call.1']
    %14 = vsyncpa [#allocation3], 0
    // Predicated region
    $region2: #{tpu_custom_call.1} parent=1 // pred_check
      _
    $region3: #{tpu_custom_call.1} parent=1 // pred_check_branch
      %16 = sbr.rel (0) target = $region5
    $region4: #{tpu_custom_call.1} parent=1 // pred_region
      _
    $region5: #{tpu_custom_call.1} parent=1 // pred_fallthru
      _
    // Predicated region
    $region6: #{tpu_custom_call.1} parent=1 // pred_check
      _
    $region7: #{tpu_custom_call.1} parent=1 // pred_check_branch
      %18 = sbr.rel (0) target = $region9
    $region8: #{tpu_custom_call.1} parent=1 // pred_region
      _
    $region9: #{tpu_custom_call.1} parent=1 // pred_fallthru
      _
    // Predicated region
    $region10: #{tpu_custom_call.1} parent=1 // pred_check
      _
    $region11: #{tpu_custom_call.1} parent=1 // pred_check_branch
      %20 = sbr.rel (0) target = $region13
    $region12: #{tpu_custom_call.1} parent=1 // pred_region
      _
    $region13: #{tpu_custom_call.1} parent=1 // pred_fallthru
      _
    // Predicated region
    $region14: #{tpu_custom_call.1} parent=1 // pred_check
      _
    $region15: #{tpu_custom_call.1} parent=1 // pred_check_branch
      %22 = sbr.rel (0) target = $region17
    $region16: #{tpu_custom_call.1} parent=1 // pred_region
      _
    $region17: #{tpu_custom_call.1} parent=1 // pred_fallthru
      _
    // Predicated region
    $region18: #{tpu_custom_call.1} parent=1 // pred_check
      _
    $region19: #{tpu_custom_call.1} parent=1 // pred_check_branch
      %24 = sbr.rel (0) target = $region21
    $region20: #{tpu_custom_call.1} parent=1 // pred_region
      _
    $region21: #{tpu_custom_call.1} parent=1 // pred_fallthru
      _
    // Predicated region
    $region22: #{tpu_custom_call.1} parent=1 // pred_check
      _
    $region23: #{tpu_custom_call.1} parent=1 // pred_check_branch
      %26 = sbr.rel (0) target = $region25
    $region24: #{tpu_custom_call.1} parent=1 // pred_region
      _
    $region25: #{tpu_custom_call.1} parent=1 // pred_fallthru
      _
    // Predicated region
    $region26: #{tpu_custom_call.1} parent=1 // pred_check
      _
    $region27: #{tpu_custom_call.1} parent=1 // pred_check_branch
      %28 = sbr.rel (0) target = $region29
    $region28: #{tpu_custom_call.1} parent=1 // pred_region
      _
    $region29: #{tpu_custom_call.1} parent=1 // pred_fallthru
      _
    // Predicated region
    $region30: #{tpu_custom_call.1} parent=1 // pred_check
      _
    $region31: #{tpu_custom_call.1} parent=1 // pred_check_branch
      %30 = sbr.rel (0) target = $region33
    $region32: #{tpu_custom_call.1} parent=1 // pred_region
      _
    $region33: #{tpu_custom_call.1} parent=1 // pred_fallthru
      _
    // Predicated region
    $region34: #{tpu_custom_call.1} parent=1 // pred_check
      _
    $region35: #{tpu_custom_call.1} parent=1 // pred_check_branch
      %32 = sbr.rel (0) target = $region37
    $region36: #{tpu_custom_call.1} parent=1 // pred_region
      _
    $region37: #{tpu_custom_call.1} parent=1 // pred_fallthru
      _
    %v33 = vld [vmem:[%s0] sm:$0xf]
    %v34 = vld [vmem:[%s1] sm:$0xff]
    %v35 = vld [vmem:[%s1 + $0x8] sm:$0xff]
    %v36 = vld [vmem:[%s1 + $0x10] sm:$0xff]
    %v37 = vld [vmem:[%s1 + $0x18] sm:$0xff]
    %v38 = vld [vmem:[%s1 + $0x20] sm:$0xff]
    %v39 = vld [vmem:[%s1 + $0x28] sm:$0xff]
    %v40 = vld [vmem:[%s1 + $0x30] sm:$0xff]
    %v41 = vld [vmem:[%s1 + $0x38] sm:$0xff]
    %v42 = vld [vmem:[%s2] sm:$0xff]
    %v43 = vld [vmem:[%s2 + $0x8] sm:$0xff]
    %v44 = vld [vmem:[%s2 + $0x10] sm:$0xff]
    %v45 = vld [vmem:[%s2 + $0x18] sm:$0xff]
    %v46 = vld [vmem:[%s2 + $0x20] sm:$0xff]
    %v47 = vld [vmem:[%s2 + $0x28] sm:$0xff]
    %v48 = vld [vmem:[%s2 + $0x30] sm:$0xff]
    %v49 = vld [vmem:[%s2 + $0x38] sm:$0xff]
    %51 = vset.pattern.permute.xlu0 0
    %52 = vperm.xlu0 %51, %v42
    %v53 = vpop.permute.xlu0 %52
    %56 = vset.pattern.permute.xlu0 0
    %57 = vperm.xlu0 %56, %v43
    %v58 = vpop.permute.xlu0 %57
    %61 = vset.pattern.permute.xlu0 0
    %62 = vperm.xlu0 %61, %v44
    %v63 = vpop.permute.xlu0 %62
    %66 = vset.pattern.permute.xlu0 0
    %67 = vperm.xlu0 %66, %v45
    %v68 = vpop.permute.xlu0 %67
    %71 = vset.pattern.permute.xlu0 0
    %72 = vperm.xlu0 %71, %v46
    %v73 = vpop.permute.xlu0 %72
    %76 = vset.pattern.permute.xlu0 0
    %77 = vperm.xlu0 %76, %v47
    %v78 = vpop.permute.xlu0 %77
    %81 = vset.pattern.permute.xlu0 0
    %82 = vperm.xlu0 %81, %v48
    %v83 = vpop.permute.xlu0 %82
    %86 = vset.pattern.permute.xlu0 0
    %87 = vperm.xlu0 %86, %v49
    %v88 = vpop.permute.xlu0 %87
    %vm90 = vcmask 31744
    %v92 = vsel %vm90, %v34, 0
    %v95 = vsel %vm90, %v35, 0
    %v98 = vsel %vm90, %v36, 0
    %v101 = vsel %vm90, %v37, 0
    %v104 = vsel %vm90, %v38, 0
    %v107 = vsel %vm90, %v39, 0
    %v110 = vsel %vm90, %v40, 0
    %v113 = vsel %vm90, %v41, 0
    %vm115 = vcmask 1043456
    %v117 = vsel %vm115, %v33, 0
    %119 = vmatprep.subr.mxu0 0.0
    %120 = vmatpush1.msra.mxu0 %v117
    %121 = vmatprep.subr.mxu0 0.0
    %122 = vmatpush1.msra.mxu0 0.0
    %123 = vmatprep.subr.mxu0 0.0
    %124 = vmatpush1.msra.mxu0 0.0
    %125 = vmatprep.subr.mxu0 0.0
    %126 = vmatpush1.msra.mxu0 0.0
    %127 = vmatprep.subr.mxu0 0.0
    %128 = vmatpush1.msra.mxu0 0.0
    %129 = vmatprep.subr.mxu0 0.0
    %130 = vmatpush1.msra.mxu0 0.0
    %131 = vmatprep.subr.mxu0 0.0
    %132 = vmatpush1.msra.mxu0 0.0
    %133 = vmatprep.subr.mxu0 0.0
    %134 = vmatpush1.msra.mxu0 0.0
    %135 = vmatprep.subr.mxu0 0.0
    %136 = vmatpush1.msra.mxu0 0.0
    %137 = vmatprep.subr.mxu0 0.0
    %138 = vmatpush1.msra.mxu0 0.0
    %139 = vmatprep.subr.mxu0 0.0
    %140 = vmatpush1.msra.mxu0 0.0
    %141 = vmatprep.subr.mxu0 0.0
    %142 = vmatpush1.msra.mxu0 0.0
    %143 = vmatprep.subr.mxu0 0.0
    %144 = vmatpush1.msra.mxu0 0.0
    %145 = vmatprep.subr.mxu0 0.0
    %146 = vmatpush1.msra.mxu0 0.0
    %147 = vmatprep.subr.mxu0 0.0
    %148 = vmatpush1.msra.mxu0 0.0
    %149 = vmatprep.subr.mxu0 0.0
    %150 = vmatpush1.msra.mxu0 0.0
    %151 = vmatprep.subr.mxu0 0.0
    %152 = vmatpush1.msra.mxu0 0.0
    %153 = vmatprep.subr.mxu0 0.0
    %154 = vmatpush1.msra.mxu0 0.0
    %155 = vmatprep.subr.mxu0 0.0
    %156 = vmatpush1.msra.mxu0 0.0
    %157 = vmatprep.subr.mxu0 0.0
    %158 = vmatpush1.msra.mxu0 0.0
    %159 = vmatprep.subr.mxu0 0.0
    %160 = vmatpush1.msra.mxu0 0.0
    %161 = vmatprep.subr.mxu0 0.0
    %162 = vmatpush1.msra.mxu0 0.0
    %163 = vmatprep.subr.mxu0 0.0
    %164 = vmatpush1.msra.mxu0 0.0
    %165 = vmatprep.subr.mxu0 0.0
    %166 = vmatpush1.msra.mxu0 0.0
    %167 = vmatprep.subr.mxu0 0.0
    %168 = vmatpush1.msra.mxu0 0.0
    %169 = vmatprep.subr.mxu0 0.0
    %170 = vmatpush1.msra.mxu0 0.0
    %171 = vmatprep.subr.mxu0 0.0
    %172 = vmatpush1.msra.mxu0 0.0
    %173 = vmatprep.subr.mxu0 0.0
    %174 = vmatpush1.msra.mxu0 0.0
    %175 = vmatprep.subr.mxu0 0.0
    %176 = vmatpush1.msra.mxu0 0.0
    %177 = vmatprep.subr.mxu0 0.0
    %178 = vmatpush1.msra.mxu0 0.0
    %179 = vmatprep.subr.mxu0 0.0
    %180 = vmatpush1.msra.mxu0 0.0
    %181 = vmatprep.subr.mxu0 0.0
    %182 = vmatpush1.msra.mxu0 0.0
    %183 = vmatprep.mubr.f32.mxu0 0.0
    %184 = vmatmul.mubr.f32.gmra.mrb[0].mxu0 %v92
    %v185 = vpop.f32.mrb[0].mxu0
    %v186 = vadd.f32 %v53, %v185
    %v187 = vpop.f32.mrb[0].mxu0
    %188 = vmatprep.mubr.f32.mxu0 0.0
    %189 = vmatmul.mubr.f32.gmra.mrb[0].mxu0 %v95
    %v190 = vpop.f32.mrb[0].mxu0
    %v191 = vadd.f32 %v58, %v190
    %v192 = vpop.f32.mrb[0].mxu0
    %193 = vmatprep.mubr.f32.mxu0 0.0
    %194 = vmatmul.mubr.f32.gmra.mrb[0].mxu0 %v98
    %v195 = vpop.f32.mrb[0].mxu0
    %v196 = vadd.f32 %v63, %v195
    %v197 = vpop.f32.mrb[0].mxu0
    %198 = vmatprep.mubr.f32.mxu0 0.0
    %199 = vmatmul.mubr.f32.gmra.mrb[0].mxu0 %v101
    %v200 = vpop.f32.mrb[0].mxu0
    %v201 = vadd.f32 %v68, %v200
    %v202 = vpop.f32.mrb[0].mxu0
    %203 = vmatprep.mubr.f32.mxu0 0.0
    %204 = vmatmul.mubr.f32.gmra.mrb[0].mxu0 %v104
    %v205 = vpop.f32.mrb[0].mxu0
    %v206 = vadd.f32 %v73, %v205
    %v207 = vpop.f32.mrb[0].mxu0
    %208 = vmatprep.mubr.f32.mxu0 0.0
    %209 = vmatmul.mubr.f32.gmra.mrb[0].mxu0 %v107
    %v210 = vpop.f32.mrb[0].mxu0
    %v211 = vadd.f32 %v78, %v210
    %v212 = vpop.f32.mrb[0].mxu0
    %213 = vmatprep.mubr.f32.mxu0 0.0
    %214 = vmatmul.mubr.f32.gmra.mrb[0].mxu0 %v110
    %v215 = vpop.f32.mrb[0].mxu0
    %v216 = vadd.f32 %v83, %v215
    %v217 = vpop.f32.mrb[0].mxu0
    %218 = vmatprep.mubr.f32.mxu0 0.0
    %219 = vmatmul.mubr.f32.gmra.mrb[0].mxu0 %v113
    %v220 = vpop.f32.mrb[0].mxu0
    %v221 = vadd.f32 %v88, %v220
    %v222 = vpop.f32.mrb[0].mxu0
    %223 = vdwg.mxu0
    %v224 = vmax.f32 %v186, %v206
    %v225 = vmax.f32 %v191, %v211
    %v226 = vmax.f32 %v196, %v216
    %v227 = vmax.f32 %v201, %v221
    %v228 = vtanh.pop %v224
    %v229 = vtanh.pop %v225
    %v230 = vtanh.pop %v226
    %v231 = vtanh.pop %v227
    %v232 = vld [vmem:[%s3] sm:$0xff]
    %v233 = vld [vmem:[%s3 + $0x8] sm:$0xff]
    %v234 = vld [vmem:[%s3 + $0x10] sm:$0xff]
    %v235 = vld [vmem:[%s3 + $0x18] sm:$0xff]
    %v236 = vld [vmem:[%s3 + $0x20] sm:$0xff]
    %v237 = vld [vmem:[%s3 + $0x28] sm:$0xff]
    %v238 = vld [vmem:[%s3 + $0x30] sm:$0xff]
    %v239 = vld [vmem:[%s3 + $0x38] sm:$0xff]
    %v240 = vld [vmem:[%s4] sm:$0xff]
    %v241 = vld [vmem:[%s4 + $0x8] sm:$0xff]
    %v242 = vld [vmem:[%s4 + $0x10] sm:$0xff]
    %v243 = vld [vmem:[%s4 + $0x18] sm:$0xff]
    %v244 = vld [vmem:[%s4 + $0x20] sm:$0xff]
    %v245 = vld [vmem:[%s4 + $0x28] sm:$0xff]
    %v246 = vld [vmem:[%s4 + $0x30] sm:$0xff]
    %v247 = vld [vmem:[%s4 + $0x38] sm:$0xff]
    %249 = vset.pattern.permute.xlu0 0
    %250 = vperm.xlu0 %249, %v240
    %v251 = vpop.permute.xlu0 %250
    %254 = vset.pattern.permute.xlu0 0
    %255 = vperm.xlu0 %254, %v241
    %v256 = vpop.permute.xlu0 %255
    %259 = vset.pattern.permute.xlu0 0
    %260 = vperm.xlu0 %259, %v242
    %v261 = vpop.permute.xlu0 %260
    %264 = vset.pattern.permute.xlu0 0
    %265 = vperm.xlu0 %264, %v243
    %v266 = vpop.permute.xlu0 %265
    %269 = vset.pattern.permute.xlu0 0
    %270 = vperm.xlu0 %269, %v244
    %v271 = vpop.permute.xlu0 %270
    %274 = vset.pattern.permute.xlu0 0
    %275 = vperm.xlu0 %274, %v245
    %v276 = vpop.permute.xlu0 %275
    %279 = vset.pattern.permute.xlu0 0
    %280 = vperm.xlu0 %279, %v246
    %v281 = vpop.permute.xlu0 %280
    %284 = vset.pattern.permute.xlu0 0
    %285 = vperm.xlu0 %284, %v247
    %v286 = vpop.permute.xlu0 %285
    %vm288 = vcmask 261120
    %v290 = vsel %vm288, %v232, 0
    %v293 = vsel %vm288, %v233, 0
    %v296 = vsel %vm288, %v234, 0
    %v299 = vsel %vm288, %v235, 0
    %v302 = vsel %vm288, %v236, 0
    %v305 = vsel %vm288, %v237, 0
    %v308 = vsel %vm288, %v238, 0
    %v311 = vsel %vm288, %v239, 0
    %313 = vmatprep.subr.mxu0 0.0
    %314 = vmatpush1.msra.mxu0 %v228
    %315 = vmatprep.subr.mxu0 0.0
    %316 = vmatpush1.msra.mxu0 %v229
    %317 = vmatprep.subr.mxu0 0.0
    %318 = vmatpush1.msra.mxu0 %v230
    %319 = vmatprep.subr.mxu0 0.0
    %320 = vmatpush1.msra.mxu0 %v231
    %321 = vmatprep.subr.mxu0 0.0
    %322 = vmatpush1.msra.mxu0 0.0
    %323 = vmatprep.subr.mxu0 0.0
    %324 = vmatpush1.msra.mxu0 0.0
    %325 = vmatprep.subr.mxu0 0.0
    %326 = vmatpush1.msra.mxu0 0.0
    %327 = vmatprep.subr.mxu0 0.0
    %328 = vmatpush1.msra.mxu0 0.0
    %329 = vmatprep.subr.mxu0 0.0
    %330 = vmatpush1.msra.mxu0 0.0
    %331 = vmatprep.subr.mxu0 0.0
    %332 = vmatpush1.msra.mxu0 0.0
    %333 = vmatprep.subr.mxu0 0.0
    %334 = vmatpush1.msra.mxu0 0.0
    %335 = vmatprep.subr.mxu0 0.0
    %336 = vmatpush1.msra.mxu0 0.0
    %337 = vmatprep.subr.mxu0 0.0
    %338 = vmatpush1.msra.mxu0 0.0
    %339 = vmatprep.subr.mxu0 0.0
    %340 = vmatpush1.msra.mxu0 0.0
    %341 = vmatprep.subr.mxu0 0.0
    %342 = vmatpush1.msra.mxu0 0.0
    %343 = vmatprep.subr.mxu0 0.0
    %344 = vmatpush1.msra.mxu0 0.0
    %345 = vmatprep.subr.mxu0 0.0
    %346 = vmatpush1.msra.mxu0 0.0
    %347 = vmatprep.subr.mxu0 0.0
    %348 = vmatpush1.msra.mxu0 0.0
    %349 = vmatprep.subr.mxu0 0.0
    %350 = vmatpush1.msra.mxu0 0.0
    %351 = vmatprep.subr.mxu0 0.0
    %352 = vmatpush1.msra.mxu0 0.0
    %353 = vmatprep.subr.mxu0 0.0
    %354 = vmatpush1.msra.mxu0 0.0
    %355 = vmatprep.subr.mxu0 0.0
    %356 = vmatpush1.msra.mxu0 0.0
    %357 = vmatprep.subr.mxu0 0.0
    %358 = vmatpush1.msra.mxu0 0.0
    %359 = vmatprep.subr.mxu0 0.0
    %360 = vmatpush1.msra.mxu0 0.0
    %361 = vmatprep.subr.mxu0 0.0
    %362 = vmatpush1.msra.mxu0 0.0
    %363 = vmatprep.subr.mxu0 0.0
    %364 = vmatpush1.msra.mxu0 0.0
    %365 = vmatprep.subr.mxu0 0.0
    %366 = vmatpush1.msra.mxu0 0.0
    %367 = vmatprep.subr.mxu0 0.0
    %368 = vmatpush1.msra.mxu0 0.0
    %369 = vmatprep.subr.mxu0 0.0
    %370 = vmatpush1.msra.mxu0 0.0
    %371 = vmatprep.subr.mxu0 0.0
    %372 = vmatpush1.msra.mxu0 0.0
    %373 = vmatprep.subr.mxu0 0.0
    %374 = vmatpush1.msra.mxu0 0.0
    %375 = vmatprep.subr.mxu0 0.0
    %376 = vmatpush1.msra.mxu0 0.0
    %377 = vmatprep.mubr.f32.mxu0 0.0
    %378 = vmatmul.mubr.f32.gmra.mrb[0].mxu0 %v290
    %v379 = vpop.f32.mrb[0].mxu0
    %v380 = vadd.f32 %v251, %v379
    %v381 = vpop.f32.mrb[0].mxu0
    %382 = vmatprep.mubr.f32.mxu0 0.0
    %383 = vmatmul.mubr.f32.gmra.mrb[0].mxu0 %v293
    %v384 = vpop.f32.mrb[0].mxu0
    %v385 = vadd.f32 %v256, %v384
    %v386 = vpop.f32.mrb[0].mxu0
    %387 = vmatprep.mubr.f32.mxu0 0.0
    %388 = vmatmul.mubr.f32.gmra.mrb[0].mxu0 %v296
    %v389 = vpop.f32.mrb[0].mxu0
    %v390 = vadd.f32 %v261, %v389
    %v391 = vpop.f32.mrb[0].mxu0
    %392 = vmatprep.mubr.f32.mxu0 0.0
    %393 = vmatmul.mubr.f32.gmra.mrb[0].mxu0 %v299
    %v394 = vpop.f32.mrb[0].mxu0
    %v395 = vadd.f32 %v266, %v394
    %v396 = vpop.f32.mrb[0].mxu0
    %397 = vmatprep.mubr.f32.mxu0 0.0
    %398 = vmatmul.mubr.f32.gmra.mrb[0].mxu0 %v302
    %v399 = vpop.f32.mrb[0].mxu0
    %v400 = vadd.f32 %v271, %v399
    %v401 = vpop.f32.mrb[0].mxu0
    %402 = vmatprep.mubr.f32.mxu0 0.0
    %403 = vmatmul.mubr.f32.gmra.mrb[0].mxu0 %v305
    %v404 = vpop.f32.mrb[0].mxu0
    %v405 = vadd.f32 %v276, %v404
    %v406 = vpop.f32.mrb[0].mxu0
    %407 = vmatprep.mubr.f32.mxu0 0.0
    %408 = vmatmul.mubr.f32.gmra.mrb[0].mxu0 %v308
    %v409 = vpop.f32.mrb[0].mxu0
    %v410 = vadd.f32 %v281, %v409
    %v411 = vpop.f32.mrb[0].mxu0
    %412 = vmatprep.mubr.f32.mxu0 0.0
    %413 = vmatmul.mubr.f32.gmra.mrb[0].mxu0 %v311
    %v414 = vpop.f32.mrb[0].mxu0
    %v415 = vadd.f32 %v286, %v414
    %v416 = vpop.f32.mrb[0].mxu0
    %417 = vdwg.mxu0
    %v418 = vmax.f32 %v380, %v400
    %v419 = vmax.f32 %v385, %v405
    %v420 = vmax.f32 %v390, %v410
    %v421 = vmax.f32 %v395, %v415
    %v422 = vtanh.pop %v418
    %v423 = vtanh.pop %v419
    %v424 = vtanh.pop %v420
    %v425 = vtanh.pop %v421
    %v426 = vld [vmem:[%s5] sm:$0xff]
    %v427 = vld [vmem:[%s5 + $0x8] sm:$0xff]
    %v428 = vld [vmem:[%s5 + $0x10] sm:$0xff]
    %v429 = vld [vmem:[%s5 + $0x18] sm:$0xff]
    %v430 = vld [vmem:[%s5 + $0x20] sm:$0xff]
    %v431 = vld [vmem:[%s5 + $0x28] sm:$0xff]
    %v432 = vld [vmem:[%s5 + $0x30] sm:$0xff]
    %v433 = vld [vmem:[%s5 + $0x38] sm:$0xff]
    %v434 = vld [vmem:[%s6] sm:$0xff]
    %v435 = vld [vmem:[%s6 + $0x8] sm:$0xff]
    %v436 = vld [vmem:[%s6 + $0x10] sm:$0xff]
    %v437 = vld [vmem:[%s6 + $0x18] sm:$0xff]
    %v438 = vld [vmem:[%s6 + $0x20] sm:$0xff]
    %v439 = vld [vmem:[%s6 + $0x28] sm:$0xff]
    %v440 = vld [vmem:[%s6 + $0x30] sm:$0xff]
    %v441 = vld [vmem:[%s6 + $0x38] sm:$0xff]
    %443 = vset.pattern.permute.xlu0 0
    %444 = vperm.xlu0 %443, %v434
    %v445 = vpop.permute.xlu0 %444
    %448 = vset.pattern.permute.xlu0 0
    %449 = vperm.xlu0 %448, %v435
    %v450 = vpop.permute.xlu0 %449
    %453 = vset.pattern.permute.xlu0 0
    %454 = vperm.xlu0 %453, %v436
    %v455 = vpop.permute.xlu0 %454
    %458 = vset.pattern.permute.xlu0 0
    %459 = vperm.xlu0 %458, %v437
    %v460 = vpop.permute.xlu0 %459
    %463 = vset.pattern.permute.xlu0 0
    %464 = vperm.xlu0 %463, %v438
    %v465 = vpop.permute.xlu0 %464
    %468 = vset.pattern.permute.xlu0 0
    %469 = vperm.xlu0 %468, %v439
    %v470 = vpop.permute.xlu0 %469
    %473 = vset.pattern.permute.xlu0 0
    %474 = vperm.xlu0 %473, %v440
    %v475 = vpop.permute.xlu0 %474
    %478 = vset.pattern.permute.xlu0 0
    %479 = vperm.xlu0 %478, %v441
    %v480 = vpop.permute.xlu0 %479
    %v483 = vsel %vm288, %v426, 0
    %v486 = vsel %vm288, %v427, 0
    %v489 = vsel %vm288, %v428, 0
    %v492 = vsel %vm288, %v429, 0
    %v495 = vsel %vm288, %v430, 0
    %v498 = vsel %vm288, %v431, 0
    %v501 = vsel %vm288, %v432, 0
    %v504 = vsel %vm288, %v433, 0
    %506 = vmatprep.subr.mxu0 0.0
    %507 = vmatpush1.msra.mxu0 %v422
    %508 = vmatprep.subr.mxu0 0.0
    %509 = vmatpush1.msra.mxu0 %v423
    %510 = vmatprep.subr.mxu0 0.0
    %511 = vmatpush1.msra.mxu0 %v424
    %512 = vmatprep.subr.mxu0 0.0
    %513 = vmatpush1.msra.mxu0 %v425
    %514 = vmatprep.subr.mxu0 0.0
    %515 = vmatpush1.msra.mxu0 0.0
    %516 = vmatprep.subr.mxu0 0.0
    %517 = vmatpush1.msra.mxu0 0.0
    %518 = vmatprep.subr.mxu0 0.0
    %519 = vmatpush1.msra.mxu0 0.0
    %520 = vmatprep.subr.mxu0 0.0
    %521 = vmatpush1.msra.mxu0 0.0
    %522 = vmatprep.subr.mxu0 0.0
    %523 = vmatpush1.msra.mxu0 0.0
    %524 = vmatprep.subr.mxu0 0.0
    %525 = vmatpush1.msra.mxu0 0.0
    %526 = vmatprep.subr.mxu0 0.0
    %527 = vmatpush1.msra.mxu0 0.0
    %528 = vmatprep.subr.mxu0 0.0
    %529 = vmatpush1.msra.mxu0 0.0
    %530 = vmatprep.subr.mxu0 0.0
    %531 = vmatpush1.msra.mxu0 0.0
    %532 = vmatprep.subr.mxu0 0.0
    %533 = vmatpush1.msra.mxu0 0.0
    %534 = vmatprep.subr.mxu0 0.0
    %535 = vmatpush1.msra.mxu0 0.0
    %536 = vmatprep.subr.mxu0 0.0
    %537 = vmatpush1.msra.mxu0 0.0
    %538 = vmatprep.subr.mxu0 0.0
    %539 = vmatpush1.msra.mxu0 0.0
    %540 = vmatprep.subr.mxu0 0.0
    %541 = vmatpush1.msra.mxu0 0.0
    %542 = vmatprep.subr.mxu0 0.0
    %543 = vmatpush1.msra.mxu0 0.0
    %544 = vmatprep.subr.mxu0 0.0
    %545 = vmatpush1.msra.mxu0 0.0
    %546 = vmatprep.subr.mxu0 0.0
    %547 = vmatpush1.msra.mxu0 0.0
    %548 = vmatprep.subr.mxu0 0.0
    %549 = vmatpush1.msra.mxu0 0.0
    %550 = vmatprep.subr.mxu0 0.0
    %551 = vmatpush1.msra.mxu0 0.0
    %552 = vmatprep.subr.mxu0 0.0
    %553 = vmatpush1.msra.mxu0 0.0
    %554 = vmatprep.subr.mxu0 0.0
    %555 = vmatpush1.msra.mxu0 0.0
    %556 = vmatprep.subr.mxu0 0.0
    %557 = vmatpush1.msra.mxu0 0.0
    %558 = vmatprep.subr.mxu0 0.0
    %559 = vmatpush1.msra.mxu0 0.0
    %560 = vmatprep.subr.mxu0 0.0
    %561 = vmatpush1.msra.mxu0 0.0
    %562 = vmatprep.subr.mxu0 0.0
    %563 = vmatpush1.msra.mxu0 0.0
    %564 = vmatprep.subr.mxu0 0.0
    %565 = vmatpush1.msra.mxu0 0.0
    %566 = vmatprep.subr.mxu0 0.0
    %567 = vmatpush1.msra.mxu0 0.0
    %568 = vmatprep.subr.mxu0 0.0
    %569 = vmatpush1.msra.mxu0 0.0
    %570 = vmatprep.mubr.f32.mxu0 0.0
    %571 = vmatmul.mubr.f32.gmra.mrb[0].mxu0 %v483
    %v572 = vpop.f32.mrb[0].mxu0
    %v573 = vadd.f32 %v445, %v572
    %v574 = vpop.f32.mrb[0].mxu0
    %575 = vmatprep.mubr.f32.mxu0 0.0
    %576 = vmatmul.mubr.f32.gmra.mrb[0].mxu0 %v486
    %v577 = vpop.f32.mrb[0].mxu0
    %v578 = vadd.f32 %v450, %v577
    %v579 = vpop.f32.mrb[0].mxu0
    %580 = vmatprep.mubr.f32.mxu0 0.0
    %581 = vmatmul.mubr.f32.gmra.mrb[0].mxu0 %v489
    %v582 = vpop.f32.mrb[0].mxu0
    %v583 = vadd.f32 %v455, %v582
    %v584 = vpop.f32.mrb[0].mxu0
    %585 = vmatprep.mubr.f32.mxu0 0.0
    %586 = vmatmul.mubr.f32.gmra.mrb[0].mxu0 %v492
    %v587 = vpop.f32.mrb[0].mxu0
    %v588 = vadd.f32 %v460, %v587
    %v589 = vpop.f32.mrb[0].mxu0
    %590 = vmatprep.mubr.f32.mxu0 0.0
    %591 = vmatmul.mubr.f32.gmra.mrb[0].mxu0 %v495
    %v592 = vpop.f32.mrb[0].mxu0
    %v593 = vadd.f32 %v465, %v592
    %v594 = vpop.f32.mrb[0].mxu0
    %595 = vmatprep.mubr.f32.mxu0 0.0
    %596 = vmatmul.mubr.f32.gmra.mrb[0].mxu0 %v498
    %v597 = vpop.f32.mrb[0].mxu0
    %v598 = vadd.f32 %v470, %v597
    %v599 = vpop.f32.mrb[0].mxu0
    %600 = vmatprep.mubr.f32.mxu0 0.0
    %601 = vmatmul.mubr.f32.gmra.mrb[0].mxu0 %v501
    %v602 = vpop.f32.mrb[0].mxu0
    %v603 = vadd.f32 %v475, %v602
    %v604 = vpop.f32.mrb[0].mxu0
    %605 = vmatprep.mubr.f32.mxu0 0.0
    %606 = vmatmul.mubr.f32.gmra.mrb[0].mxu0 %v504
    %v607 = vpop.f32.mrb[0].mxu0
    %v608 = vadd.f32 %v480, %v607
    %v609 = vpop.f32.mrb[0].mxu0
    %610 = vdwg.mxu0
    %v611 = vmax.f32 %v573, 0.0
    %v612 = vmax.f32 %v578, 0.0
    %v613 = vmax.f32 %v583, 0.0
    %v614 = vmax.f32 %v588, 0.0
    %v615 = vmax.f32 %v593, 0.0
    %v616 = vmax.f32 %v598, 0.0
    %v617 = vmax.f32 %v603, 0.0
    %v618 = vmax.f32 %v608, 0.0
    %v619 = vld [vmem:[%s7] sm:$0xf]
    %v620 = vld [vmem:[%s8] sm:$0xf]
    %622 = vset.pattern.permute.xlu0 0
    %623 = vperm.xlu0 %622, %v620
    %v624 = vpop.permute.xlu0 %623
    %vm626 = vcmask 523264
    %v628 = vsel %vm626, %v619, 0
    %630 = vmatprep.subr.mxu0 0.0
    %631 = vmatpush1.msra.mxu0 %v611
    %632 = vmatprep.subr.mxu0 0.0
    %633 = vmatpush1.msra.mxu0 %v612
    %634 = vmatprep.subr.mxu0 0.0
    %635 = vmatpush1.msra.mxu0 %v613
    %636 = vmatprep.subr.mxu0 0.0
    %637 = vmatpush1.msra.mxu0 %v614
    %638 = vmatprep.subr.mxu0 0.0
    %639 = vmatpush1.msra.mxu0 %v615
    %640 = vmatprep.subr.mxu0 0.0
    %641 = vmatpush1.msra.mxu0 %v616
    %642 = vmatprep.subr.mxu0 0.0
    %643 = vmatpush1.msra.mxu0 %v617
    %644 = vmatprep.subr.mxu0 0.0
    %645 = vmatpush1.msra.mxu0 %v618
    %646 = vmatprep.subr.mxu0 0.0
    %647 = vmatpush1.msra.mxu0 0.0
    %648 = vmatprep.subr.mxu0 0.0
    %649 = vmatpush1.msra.mxu0 0.0
    %650 = vmatprep.subr.mxu0 0.0
    %651 = vmatpush1.msra.mxu0 0.0
    %652 = vmatprep.subr.mxu0 0.0
    %653 = vmatpush1.msra.mxu0 0.0
    %654 = vmatprep.subr.mxu0 0.0
    %655 = vmatpush1.msra.mxu0 0.0
    %656 = vmatprep.subr.mxu0 0.0
    %657 = vmatpush1.msra.mxu0 0.0
    %658 = vmatprep.subr.mxu0 0.0
    %659 = vmatpush1.msra.mxu0 0.0
    %660 = vmatprep.subr.mxu0 0.0
    %661 = vmatpush1.msra.mxu0 0.0
    %662 = vmatprep.subr.mxu0 0.0
    %663 = vmatpush1.msra.mxu0 0.0
    %664 = vmatprep.subr.mxu0 0.0
    %665 = vmatpush1.msra.mxu0 0.0
    %666 = vmatprep.subr.mxu0 0.0
    %667 = vmatpush1.msra.mxu0 0.0
    %668 = vmatprep.subr.mxu0 0.0
    %669 = vmatpush1.msra.mxu0 0.0
    %670 = vmatprep.subr.mxu0 0.0
    %671 = vmatpush1.msra.mxu0 0.0
    %672 = vmatprep.subr.mxu0 0.0
    %673 = vmatpush1.msra.mxu0 0.0
    %674 = vmatprep.subr.mxu0 0.0
    %675 = vmatpush1.msra.mxu0 0.0
    %676 = vmatprep.subr.mxu0 0.0
    %677 = vmatpush1.msra.mxu0 0.0
    %678 = vmatprep.subr.mxu0 0.0
    %679 = vmatpush1.msra.mxu0 0.0
    %680 = vmatprep.subr.mxu0 0.0
    %681 = vmatpush1.msra.mxu0 0.0
    %682 = vmatprep.subr.mxu0 0.0
    %683 = vmatpush1.msra.mxu0 0.0
    %684 = vmatprep.subr.mxu0 0.0
    %685 = vmatpush1.msra.mxu0 0.0
    %686 = vmatprep.subr.mxu0 0.0
    %687 = vmatpush1.msra.mxu0 0.0
    %688 = vmatprep.subr.mxu0 0.0
    %689 = vmatpush1.msra.mxu0 0.0
    %690 = vmatprep.subr.mxu0 0.0
    %691 = vmatpush1.msra.mxu0 0.0
    %692 = vmatprep.subr.mxu0 0.0
    %693 = vmatpush1.msra.mxu0 0.0
    %694 = vmatprep.mubr.f32.mxu0 0.0
    %695 = vmatmul.mubr.f32.gmra.mrb[0].mxu0 %v628
    %v696 = vpop.f32.mrb[0].mxu0
    %v697 = vadd.f32 %v624, %v696
    %v698 = vpop.f32.mrb[0].mxu0
    %699 = vdwg.mxu0
    %700 = vst [vmem:[#allocation2] sm:$0xf] %v697
    // Predicated region
    $region38: #{tpu_custom_call.1} parent=1 // pred_check
      _
    $region39: #{tpu_custom_call.1} parent=1 // pred_check_branch
      %702 = sbr.rel (0) target = $region41
    $region40: #{tpu_custom_call.1} parent=1 // pred_region
      %s704 = ssub.s32 64, 64
      %705 = vsyncadd [#allocation3], %s704
      %s707 = sshll.u32 [#allocation2], 4
      %s708 = int_to_ptr.vmem [resolvable:$true] %s707
      %710 = dma.vmem_to_hbm [thread:$0]  %s708, 64, %s9, [#allocation3]
    $region41: #{tpu_custom_call.1} parent=1 // pred_fallthru
      _
    // Predicated region
    $region42: #{tpu_custom_call.1} parent=1 // pred_check
      _
    $region43: #{tpu_custom_call.1} parent=1 // pred_check_branch
      %712 = sbr.rel (0) target = $region45
    $region44: #{tpu_custom_call.1} parent=1 // pred_region
      %713 = dma.done [#allocation3], 64
    $region45: #{tpu_custom_call.1} parent=1 // pred_fallthru
      _
    %714 = vsyncpa [#allocation3], 1

</llo_original>
